<compile_context>
chip_gen: v7x
topology: tpu7x:2x2x1
jax: 0.10.0
libtpu: 0.0.40
codegen_flags: <defaults>
</compile_context>

<pallas_src>
import math

import jax
import jax.numpy as jnp
from jax.experimental import pallas as pl
from jax.experimental.pallas import tpu as pltpu


def _channel_attn_kernel(x_ref, w1_ref, b1_ref, w2_ref, b2_ref, out_ref):
    # x_ref:   (TB, C, N)  NCHW frames, spatial flattened onto the lane axis
    # w1_ref:  (C, Ch)     b1_ref: (1, Ch)   with Ch = C // reduction_ratio
    # w2_ref:  (Ch, C)     b2_ref: (1, C)
    # out_ref: (TB, 1, C)  per-channel sigmoid scale
    x = x_ref[...].astype(jnp.float32)                        # (TB, C, N)
    inv_n = 1.0 / float(x.shape[-1])

    # Adaptive avg / max pooling over the spatial (lane) axis -> XLU reduces.
    avg = jnp.sum(x, axis=-1) * inv_n                         # (TB, C)
    mx = jnp.max(x, axis=-1)                                  # (TB, C)

    w1 = w1_ref[...].astype(jnp.float32)
    b1 = b1_ref[...].astype(jnp.float32)
    w2 = w2_ref[...].astype(jnp.float32)
    b2 = b2_ref[...].astype(jnp.float32)

    h_avg = jnp.maximum(
        jnp.dot(avg, w1, preferred_element_type=jnp.float32) + b1, 0.0)
    h_max = jnp.maximum(
        jnp.dot(mx, w1, preferred_element_type=jnp.float32) + b1, 0.0)

    # fc2(h_avg) + fc2(h_max) == (h_avg + h_max) @ W2 + 2*b2   (exact fusion)
    logits = (jnp.dot(h_avg + h_max, w2, preferred_element_type=jnp.float32)
              + 2.0 * b2)                                      # (TB, C)

    scale = 1.0 / (1.0 + jnp.exp(-logits))                     # sigmoid (EUP)
    out_ref[...] = scale[:, None, :].astype(out_ref.dtype)     # (TB, 1, C)


def _pick_block_bs(bs, c, n, itemsize, vmem_tile_bytes):
    """Largest divisor of bs whose (TB, C, N) tile fits the VMEM budget,
    keeping >=2 grid steps when possible so v7x can shard across its 2 TCs."""
    per_frame = max(c * n * itemsize, 1)
    cap = max(1, int(vmem_tile_bytes // per_frame))
    if bs >= 2:
        cap = min(cap, bs // 2)
    cap = max(1, min(cap, bs))
    tb = 1
    for d in range(1, cap + 1):
        if bs % d == 0:
            tb = d
    return tb


def channel_attention(x, params, *, block_bs=None, vmem_tile_bytes=4 << 20):
    """x: (B, S, C, H, W).  Returns the per-channel scale (B, S, C, 1, 1),
    exactly as PyTorch ChannelAttention.forward."""
    B, S, C, H, W = x.shape
    N = H * W
    BS = B * S

    w1 = params["w1"]                     # (C, Ch)  pre-transposed nn.Linear
    w2 = params["w2"]                     # (Ch, C)
    Ch = w1.shape[1]
    assert w1.shape == (C, Ch) and w2.shape == (Ch, C), "weight shape mismatch"
    b1 = params["b1"].reshape(1, Ch)
    b2 = params["b2"].reshape(1, C)

    # Native NCHW flatten: channels stay on the sublane axis, spatial on lanes.
    x_flat = x.reshape(BS, C, N)

    if block_bs is None:
        block_bs = _pick_block_bs(BS, C, N, x.dtype.itemsize, vmem_tile_bytes)
    assert BS % block_bs == 0, "block_bs must divide B*S"
    grid = (BS // block_bs,)

    out = pl.pallas_call(
        _channel_attn_kernel,
        out_shape=jax.ShapeDtypeStruct((BS, 1, C), x.dtype),
        grid_spec=pltpu.PrefetchScalarGridSpec(
            num_scalar_prefetch=0,
            grid=grid,
            in_specs=[
                pl.BlockSpec((block_bs, C, N), lambda i: (i, 0, 0)),
                pl.BlockSpec((C, Ch), lambda i: (0, 0)),
                pl.BlockSpec((1, Ch), lambda i: (0, 0)),
                pl.BlockSpec((Ch, C), lambda i: (0, 0)),
                pl.BlockSpec((1, C), lambda i: (0, 0)),
            ],
            out_specs=pl.BlockSpec((block_bs, 1, C), lambda i: (i, 0, 0)),
        ),
        compiler_params=pltpu.CompilerParams(
            dimension_semantics=("parallel",),
            vmem_limit_bytes=32 << 20),
    )(x_flat, w1, b1, w2, b2)

    return out.reshape(B, S, C, 1, 1)


def _reference(x, params):
    """Pure-JAX reference mirroring the PyTorch forward (unfused)."""
    B, S, C, H, W = x.shape
    xf = x.reshape(B * S, C, H * W).astype(jnp.float32)
    avg = jnp.mean(xf, axis=-1)
    mx = jnp.max(xf, axis=-1)

    def fc(z):
        h = jnp.maximum(z @ params["w1"] + params["b1"], 0.0)
        return h @ params["w2"] + params["b2"]

    logits = fc(avg) + fc(mx)
    scale = 1.0 / (1.0 + jnp.exp(-logits))
    return scale.reshape(B, S, C, 1, 1).astype(x.dtype)


if __name__ == "__main__":
    # Small shapes consistent with the module: batch=2, seq=2, channels=32,
    # spatial 16x16, reduction_ratio=8 -> hidden=4.
    B, S, C, H, W = 2, 2, 32, 16, 16
    reduction_ratio = 8
    Ch = C // reduction_ratio

    key = jax.random.PRNGKey(0)
    kx, kw1, kb1, kw2, kb2 = jax.random.split(key, 5)

    x = jax.random.normal(kx, (B, S, C, H, W), jnp.float32)

    # nn.Linear-style init, stored pre-transposed as (fan_in, fan_out) so the
    # kernel computes y = z @ W + b.
    def lin_init(kw, kb, fan_in, fan_out):
        bound = 1.0 / math.sqrt(fan_in)
        w = jax.random.uniform(kw, (fan_in, fan_out), jnp.float32, -bound, bound)
        b = jax.random.uniform(kb, (fan_out,), jnp.float32, -bound, bound)
        return w, b

    w1, b1 = lin_init(kw1, kb1, C, Ch)
    w2, b2 = lin_init(kw2, kb2, Ch, C)
    params = {"w1": w1, "b1": b1, "w2": w2, "b2": b2}

    out = channel_attention(x, params)
    out = jax.block_until_ready(out)

    ref = _reference(x, params)
    assert out.shape == (B, S, C, 1, 1)
    assert jnp.allclose(out, ref, atol=1e-5, rtol=1e-5), "mismatch vs reference"

    print("KERNEL_OK")
</pallas_src>

<mosaic_0001>
module attributes {stable_mosaic.version = 11 : i64} {
  func.func @_channel_attn_kernel(%arg0: i32, %arg1: memref<2x32x256xf32, #tpu.memory_space<vmem>>, %arg2: memref<32x4xf32, #tpu.memory_space<vmem>>, %arg3: memref<1x4xf32, #tpu.memory_space<vmem>>, %arg4: memref<4x32xf32, #tpu.memory_space<vmem>>, %arg5: memref<1x32xf32, #tpu.memory_space<vmem>>, %arg6: memref<2x1x32xf32, #tpu.memory_space<vmem>>) attributes {dimension_semantics = [#tpu.dimension_semantics<parallel>], iteration_bounds = array<i64: 2>, scalar_prefetch = 0 : i64, scratch_operands = 0 : i64, tpu.core_type = #tpu.core_type<tc>, window_params = [{transform_indices = @transform_0, window_bounds = array<i64: 2, 32, 256>}, {pipeline_mode = #tpu.pipeline_mode<synchronous>, transform_indices = @transform_1, window_bounds = array<i64: 32, 4>}, {pipeline_mode = #tpu.pipeline_mode<synchronous>, transform_indices = @transform_2, window_bounds = array<i64: 1, 4>}, {pipeline_mode = #tpu.pipeline_mode<synchronous>, transform_indices = @transform_3, window_bounds = array<i64: 4, 32>}, {pipeline_mode = #tpu.pipeline_mode<synchronous>, transform_indices = @transform_4, window_bounds = array<i64: 1, 32>}, {transform_indices = @transform_5, window_bounds = array<i64: 2, 1, 32>}]} {
    %c0 = arith.constant 0 : index
    %c0_0 = arith.constant 0 : index
    %c0_1 = arith.constant 0 : index
    %0 = vector.load %arg1[%c0, %c0_0, %c0_1] : memref<2x32x256xf32, #tpu.memory_space<vmem>>, vector<2x32x256xf32>
    %cst = arith.constant dense<0.000000e+00> : vector<2x32xf32>
    %1 = vector.multi_reduction <add>, %0, %cst [2] : vector<2x32x256xf32> to vector<2x32xf32>
    %cst_2 = arith.constant 3.906250e-03 : f32
    %2 = vector.broadcast %cst_2 : f32 to vector<2x32xf32>
    %3 = arith.mulf %1, %2 : vector<2x32xf32>
    %cst_3 = arith.constant dense<0xFF800000> : vector<2x32xf32>
    %4 = vector.multi_reduction <maximumf>, %0, %cst_3 [2] : vector<2x32x256xf32> to vector<2x32xf32>
    %c0_4 = arith.constant 0 : index
    %c0_5 = arith.constant 0 : index
    %5 = vector.load %arg2[%c0_4, %c0_5] : memref<32x4xf32, #tpu.memory_space<vmem>>, vector<32x4xf32>
    %c0_6 = arith.constant 0 : index
    %c0_7 = arith.constant 0 : index
    %6 = vector.load %arg3[%c0_6, %c0_7] : memref<1x4xf32, #tpu.memory_space<vmem>>, vector<1x4xf32>
    %c0_8 = arith.constant 0 : index
    %c0_9 = arith.constant 0 : index
    %7 = vector.load %arg4[%c0_8, %c0_9] : memref<4x32xf32, #tpu.memory_space<vmem>>, vector<4x32xf32>
    %c0_10 = arith.constant 0 : index
    %c0_11 = arith.constant 0 : index
    %8 = vector.load %arg5[%c0_10, %c0_11] : memref<1x32xf32, #tpu.memory_space<vmem>>, vector<1x32xf32>
    %cst_12 = arith.constant dense<0.000000e+00> : vector<2x4xf32>
    %9 = tpu.matmul %3, %5, %cst_12 {dimension_numbers = #tpu.dot_dimension_numbers<[1], [0], [0], [1], [0, 0, 1, 1], [], []>} : vector<2x32xf32>, vector<32x4xf32>, vector<2x4xf32> -> vector<2x4xf32>
    %10 = vector.broadcast %6 : vector<1x4xf32> to vector<2x4xf32>
    %11 = arith.addf %9, %10 : vector<2x4xf32>
    %cst_13 = arith.constant 0.000000e+00 : f32
    %12 = vector.broadcast %cst_13 : f32 to vector<2x4xf32>
    %13 = arith.maximumf %11, %12 : vector<2x4xf32>
    %cst_14 = arith.constant dense<0.000000e+00> : vector<2x4xf32>
    %14 = tpu.matmul %4, %5, %cst_14 {dimension_numbers = #tpu.dot_dimension_numbers<[1], [0], [0], [1], [0, 0, 1, 1], [], []>} : vector<2x32xf32>, vector<32x4xf32>, vector<2x4xf32> -> vector<2x4xf32>
    %15 = vector.broadcast %6 : vector<1x4xf32> to vector<2x4xf32>
    %16 = arith.addf %14, %15 : vector<2x4xf32>
    %cst_15 = arith.constant 0.000000e+00 : f32
    %17 = vector.broadcast %cst_15 : f32 to vector<2x4xf32>
    %18 = arith.maximumf %16, %17 : vector<2x4xf32>
    %19 = arith.addf %13, %18 : vector<2x4xf32>
    %cst_16 = arith.constant dense<0.000000e+00> : vector<2x32xf32>
    %20 = tpu.matmul %19, %7, %cst_16 {dimension_numbers = #tpu.dot_dimension_numbers<[1], [0], [0], [1], [0, 0, 1, 1], [], []>} : vector<2x4xf32>, vector<4x32xf32>, vector<2x32xf32> -> vector<2x32xf32>
    %cst_17 = arith.constant 2.000000e+00 : f32
    %21 = vector.broadcast %cst_17 : f32 to vector<1x32xf32>
    %22 = arith.mulf %21, %8 : vector<1x32xf32>
    %23 = vector.broadcast %22 : vector<1x32xf32> to vector<2x32xf32>
    %24 = arith.addf %20, %23 : vector<2x32xf32>
    %cst_18 = arith.constant 0.000000e+00 : f32
    %25 = vector.broadcast %cst_18 : f32 to vector<2x32xf32>
    %26 = arith.subf %25, %24 : vector<2x32xf32>
    %27 = math.exp %26 : vector<2x32xf32>
    %cst_19 = arith.constant 1.000000e+00 : f32
    %28 = vector.broadcast %cst_19 : f32 to vector<2x32xf32>
    %29 = arith.addf %28, %27 : vector<2x32xf32>
    %cst_20 = arith.constant 1.000000e+00 : f32
    %30 = vector.broadcast %cst_20 : f32 to vector<2x32xf32>
    %31 = arith.divf %30, %29 : vector<2x32xf32>
    %32 = vector.shape_cast %31 : vector<2x32xf32> to vector<2x1x32xf32>
    %c0_21 = arith.constant 0 : index
    %c0_22 = arith.constant 0 : index
    %c0_23 = arith.constant 0 : index
    %33 = vector.load %arg6[%c0_21, %c0_22, %c0_23] : memref<2x1x32xf32, #tpu.memory_space<vmem>>, vector<2x1x32xf32>
    tpu.vector_store %arg6[%c0_21, %c0_22, %c0_23], %32 {strides = array<i32>} : memref<2x1x32xf32, #tpu.memory_space<vmem>>, vector<2x1x32xf32>,
    return
  }
  func.func @transform_0(%arg0: i32) -> (i32, i32, i32) {
    %c0_i32 = arith.constant 0 : i32
    %c0_i32_0 = arith.constant 0 : i32
    %c0_i32_1 = arith.constant 0 : i32
    return %arg0, %c0_i32, %c0_i32_0 : i32, i32, i32
  }
  func.func @transform_1(%arg0: i32) -> (i32, i32) {
    %c0_i32 = arith.constant 0 : i32
    %c0_i32_0 = arith.constant 0 : i32
    %c0_i32_1 = arith.constant 0 : i32
    return %c0_i32, %c0_i32_0 : i32, i32
  }
  func.func @transform_2(%arg0: i32) -> (i32, i32) {
    %c0_i32 = arith.constant 0 : i32
    %c0_i32_0 = arith.constant 0 : i32
    %c0_i32_1 = arith.constant 0 : i32
    return %c0_i32, %c0_i32_0 : i32, i32
  }
  func.func @transform_3(%arg0: i32) -> (i32, i32) {
    %c0_i32 = arith.constant 0 : i32
    %c0_i32_0 = arith.constant 0 : i32
    %c0_i32_1 = arith.constant 0 : i32
    return %c0_i32, %c0_i32_0 : i32, i32
  }
  func.func @transform_4(%arg0: i32) -> (i32, i32) {
    %c0_i32 = arith.constant 0 : i32
    %c0_i32_0 = arith.constant 0 : i32
    %c0_i32_1 = arith.constant 0 : i32
    return %c0_i32, %c0_i32_0 : i32, i32
  }
  func.func @transform_5(%arg0: i32) -> (i32, i32, i32) {
    %c0_i32 = arith.constant 0 : i32
    %c0_i32_0 = arith.constant 0 : i32
    %c0_i32_1 = arith.constant 0 : i32
    return %arg0, %c0_i32, %c0_i32_0 : i32, i32, i32
  }
}

</mosaic_0001>

<llo_original>
// kernel: tpu_custom_call.1
$region0: #{tpu_custom_call.1}
  #allocation0 [shape = 'u32[]', space=smem, size = 0x4, offset = 0x4, fixed_abs, tag = 'smem constant byte address 0x4 - core index']
  #allocation1 [shape = 'u32[144,128]{1,0:T(1,128)}', space=vmem, size = 0x12000, scoped, tag = 'internal scratch']
  %s0 = inlined_call_operand.hbm [shape: f32[4,32,256], index: 0, kind: input, shape index: {}]
  %s1 = inlined_call_operand.vmem [shape: f32[32,4], index: 1, kind: input, shape index: {}]
  %s2 = inlined_call_operand.vmem [shape: f32[1,4], index: 2, kind: input, shape index: {}]
  %s3 = inlined_call_operand.vmem [shape: f32[4,32], index: 3, kind: input, shape index: {}]
  %s4 = inlined_call_operand.vmem [shape: f32[1,32], index: 4, kind: input, shape index: {}]
  %s5 = inlined_call_operand.hbm [shape: f32[4,1,32], index: 5, kind: output, shape index: {}]
  %s6 = sld [smem:[#allocation0]]
  $region57: #{tpu_custom_call.1} parent=0
    _
  %s8 = ssub.s32 1, %s6
  %s9 = scalar_select 0, %s8, %s6
  $region1: #{tpu_custom_call.1} parent=0
    #allocation2 [shape = 'u8[131072]{0}', space=vmem, size = 0x20000, scoped, tag = 'input window, operand 0']
    #allocation3 [shape = 's32[2]{0}', space=sflag, size = 0x8, scoped, tag = 'scoped memory for tpu_custom_call.1']
    #allocation4 [shape = 's32[2]{0}', space=sflag, size = 0x8, scoped, tag = 'scoped memory for tpu_custom_call.1']
    #allocation5 [shape = 'u8[2048]{0}', space=vmem, size = 0x800, scoped, tag = 'output window, operand 0']
    %10 = vsyncpa [#allocation3], 0
    %s11 = scalar_lea.sflag [#allocation3], 1
    %12 = vsyncpa %s11, 0
    %13 = vsyncpa [#allocation4], 0
    %s14 = scalar_lea.sflag [#allocation4], 1
    %15 = vsyncpa %s14, 0
    loop: start=0, step=1, limit=4
    $region2: #{tpu_custom_call.1} parent=1 // loop_pre_header
      _
    $region3: #{tpu_custom_call.1} parent=1 // loop_header
      %s17 = sphi 0, %s21
      %p18 = scmp.ge.s32.totalorder %s17, 4
      %s27 = sphi 0, %s29
      %s30 = sphi 0, %s27
      %s31 = sphi 0, %s30
      %s47 = sphi 0, %s31
      %s51 = sphi 0, %s51
      %s53 = sphi 0, %s51
      %s54 = sphi 0, %s53
      %s68 = sphi 0, %s54
      %s72 = sphi 0, %s72
      %s74 = sphi 0, %s72
      %s75 = sphi 0, %s74
      %s89 = sphi 0, %s75
      %s93 = sphi 0, %s93
      %s95 = sphi 0, %s93
      %s96 = sphi 0, %s95
      %s110 = sphi 0, %s96
      %s114 = sphi 0, %s114
      %s116 = sphi 0, %s114
      %s117 = sphi 0, %s116
      %s131 = sphi 0, %s117
      %s137 = sphi 0, %s139
      %s140 = sphi 0, %s137
      %s141 = sphi 0, %s140
      %s157 = sphi 0, %s141
    $region4: #{tpu_custom_call.1} parent=1 // loop_header_branch
      %20 = sbr.rel (%p18) target = $region8
    $region5: #{tpu_custom_call.1} parent=1 // loop_body
      %s22 = ssub.s32 %s17, 1
      %s23 = ssub.s32 %s17, 2
      %s24 = sadd.s32 %s17, 1
      %s25 = ssub.s32 %s17, %s24
      %p26 = scmp.eq.s32.totalorder %s25, 0
      %s28 = sadd.s32 %s27, 1
      %s29 = scalar_select %p26, %s27, %s28
      %p32 = pneg %p26
      %p33 = scmp.eq.s32.totalorder %s17, 1
      %p34 = por %p32, %p33
      %p35 = scmp.ne.s32.totalorder %s27, %s30
      %p36 = scmp.eq.s32.totalorder %s17, 0
      %p37 = por %p35, %p36
      %p38 = scmp.ne.s32.totalorder %s27, %s30
      %p39 = scmp.eq.s32.totalorder %s22, 1
      %p40 = por %p38, %p39
      %p41 = scmp.ne.s32.totalorder %s30, %s31
      %p42 = scmp.eq.s32.totalorder %s22, 0
      %p43 = por %p41, %p42
      %p44 = scmp.ne.s32.totalorder %s30, %s31
      %p45 = scmp.eq.s32.totalorder %s23, 1
      %p46 = por %p44, %p45
      %p48 = scmp.ne.s32.totalorder %s31, %s47
      %p49 = scmp.eq.s32.totalorder %s23, 0
      %p50 = por %p48, %p49
      %s52 = sadd.s32 %s51, 1
      %p55 = scmp.eq.s32.totalorder %s17, 1
      %p56 = scmp.ne.s32.totalorder %s51, %s53
      %p57 = scmp.eq.s32.totalorder %s17, 0
      %p58 = por %p56, %p57
      %p59 = scmp.ne.s32.totalorder %s51, %s53
      %p60 = scmp.eq.s32.totalorder %s22, 1
      %p61 = por %p59, %p60
      %p62 = scmp.ne.s32.totalorder %s53, %s54
      %p63 = scmp.eq.s32.totalorder %s22, 0
      %p64 = por %p62, %p63
      %p65 = scmp.ne.s32.totalorder %s53, %s54
      %p66 = scmp.eq.s32.totalorder %s23, 1
      %p67 = por %p65, %p66
      %p69 = scmp.ne.s32.totalorder %s54, %s68
      %p70 = scmp.eq.s32.totalorder %s23, 0
      %p71 = por %p69, %p70
      %s73 = sadd.s32 %s72, 1
      %p76 = scmp.eq.s32.totalorder %s17, 1
      %p77 = scmp.ne.s32.totalorder %s72, %s74
      %p78 = scmp.eq.s32.totalorder %s17, 0
      %p79 = por %p77, %p78
      %p80 = scmp.ne.s32.totalorder %s72, %s74
      %p81 = scmp.eq.s32.totalorder %s22, 1
      %p82 = por %p80, %p81
      %p83 = scmp.ne.s32.totalorder %s74, %s75
      %p84 = scmp.eq.s32.totalorder %s22, 0
      %p85 = por %p83, %p84
      %p86 = scmp.ne.s32.totalorder %s74, %s75
      %p87 = scmp.eq.s32.totalorder %s23, 1
      %p88 = por %p86, %p87
      %p90 = scmp.ne.s32.totalorder %s75, %s89
      %p91 = scmp.eq.s32.totalorder %s23, 0
      %p92 = por %p90, %p91
      %s94 = sadd.s32 %s93, 1
      %p97 = scmp.eq.s32.totalorder %s17, 1
      %p98 = scmp.ne.s32.totalorder %s93, %s95
      %p99 = scmp.eq.s32.totalorder %s17, 0
      %p100 = por %p98, %p99
      %p101 = scmp.ne.s32.totalorder %s93, %s95
      %p102 = scmp.eq.s32.totalorder %s22, 1
      %p103 = por %p101, %p102
      %p104 = scmp.ne.s32.totalorder %s95, %s96
      %p105 = scmp.eq.s32.totalorder %s22, 0
      %p106 = por %p104, %p105
      %p107 = scmp.ne.s32.totalorder %s95, %s96
      %p108 = scmp.eq.s32.totalorder %s23, 1
      %p109 = por %p107, %p108
      %p111 = scmp.ne.s32.totalorder %s96, %s110
      %p112 = scmp.eq.s32.totalorder %s23, 0
      %p113 = por %p111, %p112
      %s115 = sadd.s32 %s114, 1
      %p118 = scmp.eq.s32.totalorder %s17, 1
      %p119 = scmp.ne.s32.totalorder %s114, %s116
      %p120 = scmp.eq.s32.totalorder %s17, 0
      %p121 = por %p119, %p120
      %p122 = scmp.ne.s32.totalorder %s114, %s116
      %p123 = scmp.eq.s32.totalorder %s22, 1
      %p124 = por %p122, %p123
      %p125 = scmp.ne.s32.totalorder %s116, %s117
      %p126 = scmp.eq.s32.totalorder %s22, 0
      %p127 = por %p125, %p126
      %p128 = scmp.ne.s32.totalorder %s116, %s117
      %p129 = scmp.eq.s32.totalorder %s23, 1
      %p130 = por %p128, %p129
      %p132 = scmp.ne.s32.totalorder %s117, %s131
      %p133 = scmp.eq.s32.totalorder %s23, 0
      %p134 = por %p132, %p133
      %s135 = ssub.s32 %s17, %s24
      %p136 = scmp.eq.s32.totalorder %s135, 0
      %s138 = sadd.s32 %s137, 1
      %s139 = scalar_select %p136, %s137, %s138
      %p142 = pneg %p136
      %p143 = scmp.eq.s32.totalorder %s17, 1
      %p144 = por %p142, %p143
      %p145 = scmp.ne.s32.totalorder %s137, %s140
      %p146 = scmp.eq.s32.totalorder %s17, 0
      %p147 = por %p145, %p146
      %p148 = scmp.ne.s32.totalorder %s137, %s140
      %p149 = scmp.eq.s32.totalorder %s22, 1
      %p150 = por %p148, %p149
      %p151 = scmp.ne.s32.totalorder %s140, %s141
      %p152 = scmp.eq.s32.totalorder %s22, 0
      %p153 = por %p151, %p152
      %p154 = scmp.ne.s32.totalorder %s140, %s141
      %p155 = scmp.eq.s32.totalorder %s23, 1
      %p156 = por %p154, %p155
      %p158 = scmp.ne.s32.totalorder %s141, %s157
      %p159 = scmp.eq.s32.totalorder %s23, 0
      %p160 = por %p158, %p159
      %p161 = scmp.le.s32.totalorder 1, %s17
      %p162 = scmp.lt.s32.totalorder %s17, 3
      %p163 = pnand %p161, %p162
      %p164 = pneg %p163
      // Predicated region
      $region9: #{tpu_custom_call.1} parent=5 // pred_check
        _
      $region10: #{tpu_custom_call.1} parent=5 // pred_check_branch
        %166 = sbr.rel (%p163) target = $region12
      $region11: #{tpu_custom_call.1} parent=5 // pred_region
        %s167 = ssub.s32 %s17, 1
        // Predicated region
        $region13: #{tpu_custom_call.1} parent=11 // pred_check
          %p168 = pneg %p64
        $region14: #{tpu_custom_call.1} parent=11 // pred_check_branch
          %170 = sbr.rel (%p168) target = $region16
        $region15: #{tpu_custom_call.1} parent=11 // pred_region
          _
        $region16: #{tpu_custom_call.1} parent=11 // pred_fallthru
          _
        // Predicated region
        $region17: #{tpu_custom_call.1} parent=11 // pred_check
          %p171 = pneg %p85
        $region18: #{tpu_custom_call.1} parent=11 // pred_check_branch
          %173 = sbr.rel (%p171) target = $region20
        $region19: #{tpu_custom_call.1} parent=11 // pred_region
          _
        $region20: #{tpu_custom_call.1} parent=11 // pred_fallthru
          _
        // Predicated region
        $region21: #{tpu_custom_call.1} parent=11 // pred_check
          %p174 = pneg %p106
        $region22: #{tpu_custom_call.1} parent=11 // pred_check_branch
          %176 = sbr.rel (%p174) target = $region24
        $region23: #{tpu_custom_call.1} parent=11 // pred_region
          _
        $region24: #{tpu_custom_call.1} parent=11 // pred_fallthru
          _
        // Predicated region
        $region25: #{tpu_custom_call.1} parent=11 // pred_check
          %p177 = pneg %p127
        $region26: #{tpu_custom_call.1} parent=11 // pred_check_branch
          %179 = sbr.rel (%p177) target = $region28
        $region27: #{tpu_custom_call.1} parent=11 // pred_region
          _
        $region28: #{tpu_custom_call.1} parent=11 // pred_fallthru
          _
      $region12: #{tpu_custom_call.1} parent=5 // pred_fallthru
        _
      %p180 = scmp.lt.s32.totalorder %s17, 2
      // Predicated region
      $region29: #{tpu_custom_call.1} parent=5 // pred_check
        %p181 = pneg %p180
      $region30: #{tpu_custom_call.1} parent=5 // pred_check_branch
        %183 = sbr.rel (%p181) target = $region32
      $region31: #{tpu_custom_call.1} parent=5 // pred_region
        // Predicated region
        $region33: #{tpu_custom_call.1} parent=31 // pred_check
          %p184 = pneg %p37
        $region34: #{tpu_custom_call.1} parent=31 // pred_check_branch
          %186 = sbr.rel (%p184) target = $region36
        $region35: #{tpu_custom_call.1} parent=31 // pred_region
          %s187 = sand.u32 %s27, 1
          %s188 = scalar_lea.sflag [#allocation3], %s187
          %s189 = sand.u32 %s27, 1
          %s190 = smul.addr %s189, 128
          %s191 = scalar_lea.vmem [#allocation2], %s190
          %s192 = smul.u32 2, %s17
          %s194 = ssub.s32 2048, 2048
          %195 = vsyncadd %s188, %s194
          %s196 = smul.addr %s192, 8
          %s197 = smul.addr %s196, 128
          %s198 = scalar_lea.hbm %s0, %s197
          %s199 = sshll.u32 %s191, 4
          %s200 = int_to_ptr.vmem [resolvable:$true] %s199
          %205 = dma.hbm_to_vmem [thread:$0]  %s198, 2048, %s200, %s188, 256, 256, 16
        $region36: #{tpu_custom_call.1} parent=31 // pred_fallthru
          _
      $region32: #{tpu_custom_call.1} parent=5 // pred_fallthru
        _
      %p206 = scmp.le.s32.totalorder 1, %s17
      %p207 = scmp.lt.s32.totalorder %s17, 3
      %p208 = pnand %p206, %p207
      %p209 = pneg %p208
      // Predicated region
      $region37: #{tpu_custom_call.1} parent=5 // pred_check
        _
      $region38: #{tpu_custom_call.1} parent=5 // pred_check_branch
        %211 = sbr.rel (%p208) target = $region40
      $region39: #{tpu_custom_call.1} parent=5 // pred_region
        %s212 = ssub.s32 %s17, 1
        %s213 = sand.u32 %s30, 1
        %s214 = scalar_lea.sflag [#allocation3], %s213
        %s215 = sand.u32 %s30, 1
        %s216 = smul.addr %s215, 128
        %s217 = scalar_lea.vmem [#allocation2], %s216
        // Predicated region
        $region41: #{tpu_custom_call.1} parent=39 // pred_check
          %p218 = pneg %p43
        $region42: #{tpu_custom_call.1} parent=39 // pred_check_branch
          %220 = sbr.rel (%p218) target = $region44
        $region43: #{tpu_custom_call.1} parent=39 // pred_region
          %221 = dma.done %s214, 2048
        $region44: #{tpu_custom_call.1} parent=39 // pred_fallthru
          _
        %s222 = sand.u32 %s30, 1
        %s223 = scalar_lea.sflag [#allocation3], %s222
        %s224 = sand.u32 %s30, 1
        %s225 = smul.addr %s224, 128
        %s226 = scalar_lea.vmem [#allocation2], %s225
        %p227 = pneg %p43
        %p228 = pneg %p40
        %p229 = pneg %p64
        %p230 = pneg %p61
        %p231 = pneg %p85
        %p232 = pneg %p82
        %p233 = pneg %p106
        %p234 = pneg %p103
        %p235 = pneg %p127
        %p236 = pneg %p124
        %p237 = pneg %p153
        %p238 = pneg %p150
        %s239 = sand.u32 %s140, 1
        %s240 = scalar_lea.sflag [#allocation4], %s239
        %s241 = sand.u32 %s140, 1
        %s242 = smul.addr %s241, 2
        %s243 = scalar_lea.vmem [#allocation5], %s242
        %s244 = smul.u32 2, %s22
        %s245 = smul.u32 2, %s22
        %v246 = vld [vmem:[%s217] sm:$0xff]
        %v247 = vld [vmem:[%s217 + $0x8] sm:$0xff]
        %v248 = vld [vmem:[%s217 + $0x10] sm:$0xff]
        %v249 = vld [vmem:[%s217 + $0x18] sm:$0xff]
        %v250 = vld [vmem:[%s217 + $0x20] sm:$0xff]
        %v251 = vld [vmem:[%s217 + $0x28] sm:$0xff]
        %v252 = vld [vmem:[%s217 + $0x30] sm:$0xff]
        %v253 = vld [vmem:[%s217 + $0x38] sm:$0xff]
        %v254 = vld [vmem:[%s217 + $0x40] sm:$0xff]
        %v255 = vld [vmem:[%s217 + $0x48] sm:$0xff]
        %v256 = vld [vmem:[%s217 + $0x50] sm:$0xff]
        %v257 = vld [vmem:[%s217 + $0x58] sm:$0xff]
        %v258 = vld [vmem:[%s217 + $0x60] sm:$0xff]
        %v259 = vld [vmem:[%s217 + $0x68] sm:$0xff]
        %v260 = vld [vmem:[%s217 + $0x70] sm:$0xff]
        %v261 = vld [vmem:[%s217 + $0x78] sm:$0xff]
        %v262 = vadd.f32 %v246, %v247
        %263 = vadd.xlane.f32.xlu0 %v262
        %v264 = vpop.xlane.xlu0 %263
        %v265 = vadd.f32 %v248, %v249
        %266 = vadd.xlane.f32.xlu0 %v265
        %v267 = vpop.xlane.xlu0 %266
        %v268 = vadd.f32 %v250, %v251
        %269 = vadd.xlane.f32.xlu0 %v268
        %v270 = vpop.xlane.xlu0 %269
        %v271 = vadd.f32 %v252, %v253
        %272 = vadd.xlane.f32.xlu0 %v271
        %v273 = vpop.xlane.xlu0 %272
        %v274 = vadd.f32 %v254, %v255
        %275 = vadd.xlane.f32.xlu0 %v274
        %v276 = vpop.xlane.xlu0 %275
        %v277 = vadd.f32 %v256, %v257
        %278 = vadd.xlane.f32.xlu0 %v277
        %v279 = vpop.xlane.xlu0 %278
        %v280 = vadd.f32 %v258, %v259
        %281 = vadd.xlane.f32.xlu0 %v280
        %v282 = vpop.xlane.xlu0 %281
        %v283 = vadd.f32 %v260, %v261
        %284 = vadd.xlane.f32.xlu0 %v283
        %v285 = vpop.xlane.xlu0 %284
        %v286 = vmul.f32 %v264, 0.00390625
        %v287 = vmul.f32 %v267, 0.00390625
        %v288 = vmul.f32 %v270, 0.00390625
        %v289 = vmul.f32 %v273, 0.00390625
        %v290 = vmul.f32 %v276, 0.00390625
        %v291 = vmul.f32 %v279, 0.00390625
        %v292 = vmul.f32 %v282, 0.00390625
        %v293 = vmul.f32 %v285, 0.00390625
        %v294 = vmax.f32 %v246, %v247
        %295 = vmax.xlane.f32.xlu0 %v294
        %v296 = vpop.xlane.xlu0 %295
        %v297 = vmax.f32 %v248, %v249
        %298 = vmax.xlane.f32.xlu0 %v297
        %v299 = vpop.xlane.xlu0 %298
        %v300 = vmax.f32 %v250, %v251
        %301 = vmax.xlane.f32.xlu0 %v300
        %v302 = vpop.xlane.xlu0 %301
        %v303 = vmax.f32 %v252, %v253
        %304 = vmax.xlane.f32.xlu0 %v303
        %v305 = vpop.xlane.xlu0 %304
        %v306 = vmax.f32 %v254, %v255
        %307 = vmax.xlane.f32.xlu0 %v306
        %v308 = vpop.xlane.xlu0 %307
        %v309 = vmax.f32 %v256, %v257
        %310 = vmax.xlane.f32.xlu0 %v309
        %v311 = vpop.xlane.xlu0 %310
        %v312 = vmax.f32 %v258, %v259
        %313 = vmax.xlane.f32.xlu0 %v312
        %v314 = vpop.xlane.xlu0 %313
        %v315 = vmax.f32 %v260, %v261
        %316 = vmax.xlane.f32.xlu0 %v315
        %v317 = vpop.xlane.xlu0 %316
        %v318 = vld [vmem:[%s1] sm:$0xff]
        %v319 = vld [vmem:[%s1 + $0x8] sm:$0xff]
        %v320 = vld [vmem:[%s1 + $0x10] sm:$0xff]
        %v321 = vld [vmem:[%s1 + $0x18] sm:$0xff]
        %v322 = vld [vmem:[%s2] sm:$0x1]
        %v323 = vld [vmem:[%s3] sm:$0xf]
        %v324 = vld [vmem:[%s4] sm:$0x1]
        %v326 = vlaneseq
        %v327 = vshrl.u32 %v326, 7
        %v328 = vsub.s32 0, %v327
        %v329 = vrot.slane %v322, %v328
        %v339 = vlaneseq
        %v340 = vand.u32 %v339, 127
        %v341 = vlaneseq
        %v342 = vshrl.u32 %v341, 7
        %v343 = vsub.s32 %v340, %v342
        %v344 = vrot.slane %v286, %v343
        %v345 = vadd.s32 %v340, 4294967288
        %v346 = vlaneseq
        %v347 = vshrl.u32 %v346, 7
        %v348 = vsub.s32 %v345, %v347
        %v349 = vrot.slane %v287, %v348
        %vm350 = vcmask 130112
        %v351 = vsel %vm350, %v349, %v344
        %v352 = vadd.s32 %v340, 4294967280
        %v353 = vlaneseq
        %v354 = vshrl.u32 %v353, 7
        %v355 = vsub.s32 %v352, %v354
        %v356 = vrot.slane %v288, %v355
        %vm357 = vcmask 195712
        %v358 = vsel %vm357, %v356, %v351
        %v359 = vadd.s32 %v340, 4294967272
        %v360 = vlaneseq
        %v361 = vshrl.u32 %v360, 7
        %v362 = vsub.s32 %v359, %v361
        %v363 = vrot.slane %v289, %v362
        %vm364 = vcmask 261312
        %v365 = vsel %vm364, %v363, %v358
        %v366 = vlaneseq
        %v367 = vshrl.u32 %v366, 7
        %v368 = vsub.s32 %v340, %v367
        %v369 = vrot.slane %v290, %v368
        %v370 = vlaneseq
        %v371 = vshrl.u32 %v370, 7
        %v372 = vsub.s32 %v345, %v371
        %v373 = vrot.slane %v291, %v372
        %v374 = vsel %vm350, %v373, %v369
        %v375 = vlaneseq
        %v376 = vshrl.u32 %v375, 7
        %v377 = vsub.s32 %v352, %v376
        %v378 = vrot.slane %v292, %v377
        %v379 = vsel %vm357, %v378, %v374
        %v380 = vlaneseq
        %v381 = vshrl.u32 %v380, 7
        %v382 = vsub.s32 %v359, %v381
        %v383 = vrot.slane %v293, %v382
        %v384 = vsel %vm364, %v383, %v379
        %vm385 = vcmask 1041409
        %v386 = vsel %vm385, %v384, %v365
        %vm387 = vcmask 261120
        %v388 = vsel %vm387, %v386, 0
        %390 = vmatprep.subr.mxu0 0.0
        %391 = vmatpush1.msra.mxu0 %v318
        %392 = vmatprep.subr.mxu0 0.0
        %393 = vmatpush1.msra.mxu0 %v319
        %394 = vmatprep.subr.mxu0 0.0
        %395 = vmatpush1.msra.mxu0 %v320
        %396 = vmatprep.subr.mxu0 0.0
        %397 = vmatpush1.msra.mxu0 %v321
        %398 = vmatprep.subr.mxu0 0.0
        %399 = vmatpush1.msra.mxu0 0.0
        %400 = vmatprep.subr.mxu0 0.0
        %401 = vmatpush1.msra.mxu0 0.0
        %402 = vmatprep.subr.mxu0 0.0
        %403 = vmatpush1.msra.mxu0 0.0
        %404 = vmatprep.subr.mxu0 0.0
        %405 = vmatpush1.msra.mxu0 0.0
        %406 = vmatprep.subr.mxu0 0.0
        %407 = vmatpush1.msra.mxu0 0.0
        %408 = vmatprep.subr.mxu0 0.0
        %409 = vmatpush1.msra.mxu0 0.0
        %410 = vmatprep.subr.mxu0 0.0
        %411 = vmatpush1.msra.mxu0 0.0
        %412 = vmatprep.subr.mxu0 0.0
        %413 = vmatpush1.msra.mxu0 0.0
        %414 = vmatprep.subr.mxu0 0.0
        %415 = vmatpush1.msra.mxu0 0.0
        %416 = vmatprep.subr.mxu0 0.0
        %417 = vmatpush1.msra.mxu0 0.0
        %418 = vmatprep.subr.mxu0 0.0
        %419 = vmatpush1.msra.mxu0 0.0
        %420 = vmatprep.subr.mxu0 0.0
        %421 = vmatpush1.msra.mxu0 0.0
        %422 = vmatprep.subr.mxu0 0.0
        %423 = vmatpush1.msra.mxu0 0.0
        %424 = vmatprep.subr.mxu0 0.0
        %425 = vmatpush1.msra.mxu0 0.0
        %426 = vmatprep.subr.mxu0 0.0
        %427 = vmatpush1.msra.mxu0 0.0
        %428 = vmatprep.subr.mxu0 0.0
        %429 = vmatpush1.msra.mxu0 0.0
        %430 = vmatprep.subr.mxu0 0.0
        %431 = vmatpush1.msra.mxu0 0.0
        %432 = vmatprep.subr.mxu0 0.0
        %433 = vmatpush1.msra.mxu0 0.0
        %434 = vmatprep.subr.mxu0 0.0
        %435 = vmatpush1.msra.mxu0 0.0
        %436 = vmatprep.subr.mxu0 0.0
        %437 = vmatpush1.msra.mxu0 0.0
        %438 = vmatprep.subr.mxu0 0.0
        %439 = vmatpush1.msra.mxu0 0.0
        %440 = vmatprep.subr.mxu0 0.0
        %441 = vmatpush1.msra.mxu0 0.0
        %442 = vmatprep.subr.mxu0 0.0
        %443 = vmatpush1.msra.mxu0 0.0
        %444 = vmatprep.subr.mxu0 0.0
        %445 = vmatpush1.msra.mxu0 0.0
        %446 = vmatprep.subr.mxu0 0.0
        %447 = vmatpush1.msra.mxu0 0.0
        %448 = vmatprep.subr.mxu0 0.0
        %449 = vmatpush1.msra.mxu0 0.0
        %450 = vmatprep.subr.mxu0 0.0
        %451 = vmatpush1.msra.mxu0 0.0
        %452 = vmatprep.subr.mxu0 0.0
        %453 = vmatpush1.msra.mxu0 0.0
        %454 = vmatprep.mubr.f32.mxu0 0.0
        %455 = vmatmul.mubr.f32.gmra.mrb[0].mxu0 %v388
        %v456 = vpop.f32.mrb[0].mxu0
        %v457 = vadd.f32 %v329, %v456
        %v458 = vpop.f32.mrb[0].mxu0
        %459 = vdwg.mxu0
        %v460 = vmax.f32 %v457, 0.0
        %v469 = vlaneseq
        %v470 = vshrl.u32 %v469, 7
        %v471 = vsub.s32 %v340, %v470
        %v472 = vrot.slane %v296, %v471
        %v473 = vlaneseq
        %v474 = vshrl.u32 %v473, 7
        %v475 = vsub.s32 %v345, %v474
        %v476 = vrot.slane %v299, %v475
        %v477 = vsel %vm350, %v476, %v472
        %v478 = vlaneseq
        %v479 = vshrl.u32 %v478, 7
        %v480 = vsub.s32 %v352, %v479
        %v481 = vrot.slane %v302, %v480
        %v482 = vsel %vm357, %v481, %v477
        %v483 = vlaneseq
        %v484 = vshrl.u32 %v483, 7
        %v485 = vsub.s32 %v359, %v484
        %v486 = vrot.slane %v305, %v485
        %v487 = vsel %vm364, %v486, %v482
        %v488 = vlaneseq
        %v489 = vshrl.u32 %v488, 7
        %v490 = vsub.s32 %v340, %v489
        %v491 = vrot.slane %v308, %v490
        %v492 = vlaneseq
        %v493 = vshrl.u32 %v492, 7
        %v494 = vsub.s32 %v345, %v493
        %v495 = vrot.slane %v311, %v494
        %v496 = vsel %vm350, %v495, %v491
        %v497 = vlaneseq
        %v498 = vshrl.u32 %v497, 7
        %v499 = vsub.s32 %v352, %v498
        %v500 = vrot.slane %v314, %v499
        %v501 = vsel %vm357, %v500, %v496
        %v502 = vlaneseq
        %v503 = vshrl.u32 %v502, 7
        %v504 = vsub.s32 %v359, %v503
        %v505 = vrot.slane %v317, %v504
        %v506 = vsel %vm364, %v505, %v501
        %v507 = vsel %vm385, %v506, %v487
        %v508 = vsel %vm387, %v507, 0
        %510 = vmatprep.subr.mxu0 0.0
        %511 = vmatpush1.msra.mxu0 %v318
        %512 = vmatprep.subr.mxu0 0.0
        %513 = vmatpush1.msra.mxu0 %v319
        %514 = vmatprep.subr.mxu0 0.0
        %515 = vmatpush1.msra.mxu0 %v320
        %516 = vmatprep.subr.mxu0 0.0
        %517 = vmatpush1.msra.mxu0 %v321
        %518 = vmatprep.subr.mxu0 0.0
        %519 = vmatpush1.msra.mxu0 0.0
        %520 = vmatprep.subr.mxu0 0.0
        %521 = vmatpush1.msra.mxu0 0.0
        %522 = vmatprep.subr.mxu0 0.0
        %523 = vmatpush1.msra.mxu0 0.0
        %524 = vmatprep.subr.mxu0 0.0
        %525 = vmatpush1.msra.mxu0 0.0
        %526 = vmatprep.subr.mxu0 0.0
        %527 = vmatpush1.msra.mxu0 0.0
        %528 = vmatprep.subr.mxu0 0.0
        %529 = vmatpush1.msra.mxu0 0.0
        %530 = vmatprep.subr.mxu0 0.0
        %531 = vmatpush1.msra.mxu0 0.0
        %532 = vmatprep.subr.mxu0 0.0
        %533 = vmatpush1.msra.mxu0 0.0
        %534 = vmatprep.subr.mxu0 0.0
        %535 = vmatpush1.msra.mxu0 0.0
        %536 = vmatprep.subr.mxu0 0.0
        %537 = vmatpush1.msra.mxu0 0.0
        %538 = vmatprep.subr.mxu0 0.0
        %539 = vmatpush1.msra.mxu0 0.0
        %540 = vmatprep.subr.mxu0 0.0
        %541 = vmatpush1.msra.mxu0 0.0
        %542 = vmatprep.subr.mxu0 0.0
        %543 = vmatpush1.msra.mxu0 0.0
        %544 = vmatprep.subr.mxu0 0.0
        %545 = vmatpush1.msra.mxu0 0.0
        %546 = vmatprep.subr.mxu0 0.0
        %547 = vmatpush1.msra.mxu0 0.0
        %548 = vmatprep.subr.mxu0 0.0
        %549 = vmatpush1.msra.mxu0 0.0
        %550 = vmatprep.subr.mxu0 0.0
        %551 = vmatpush1.msra.mxu0 0.0
        %552 = vmatprep.subr.mxu0 0.0
        %553 = vmatpush1.msra.mxu0 0.0
        %554 = vmatprep.subr.mxu0 0.0
        %555 = vmatpush1.msra.mxu0 0.0
        %556 = vmatprep.subr.mxu0 0.0
        %557 = vmatpush1.msra.mxu0 0.0
        %558 = vmatprep.subr.mxu0 0.0
        %559 = vmatpush1.msra.mxu0 0.0
        %560 = vmatprep.subr.mxu0 0.0
        %561 = vmatpush1.msra.mxu0 0.0
        %562 = vmatprep.subr.mxu0 0.0
        %563 = vmatpush1.msra.mxu0 0.0
        %564 = vmatprep.subr.mxu0 0.0
        %565 = vmatpush1.msra.mxu0 0.0
        %566 = vmatprep.subr.mxu0 0.0
        %567 = vmatpush1.msra.mxu0 0.0
        %568 = vmatprep.subr.mxu0 0.0
        %569 = vmatpush1.msra.mxu0 0.0
        %570 = vmatprep.subr.mxu0 0.0
        %571 = vmatpush1.msra.mxu0 0.0
        %572 = vmatprep.subr.mxu0 0.0
        %573 = vmatpush1.msra.mxu0 0.0
        %574 = vmatprep.mubr.f32.mxu0 0.0
        %575 = vmatmul.mubr.f32.gmra.mrb[0].mxu0 %v508
        %v576 = vpop.f32.mrb[0].mxu0
        %v577 = vadd.f32 %v329, %v576
        %v578 = vpop.f32.mrb[0].mxu0
        %579 = vdwg.mxu0
        %v580 = vmax.f32 %v577, 0.0
        %v581 = vadd.f32 %v460, %v580
        %v582 = vmul.f32 %v324, 2.0
        %v584 = vlaneseq
        %v585 = vshrl.u32 %v584, 7
        %v586 = vsub.s32 0, %v585
        %v587 = vrot.slane %v582, %v586
        %vm589 = vcmask 31744
        %v591 = vsel %vm589, %v581, 0
        %vm593 = vcmask 1043456
        %v595 = vsel %vm593, %v323, 0
        %597 = vmatprep.subr.mxu0 0.0
        %598 = vmatpush1.msra.mxu0 %v595
        %599 = vmatprep.subr.mxu0 0.0
        %600 = vmatpush1.msra.mxu0 0.0
        %601 = vmatprep.subr.mxu0 0.0
        %602 = vmatpush1.msra.mxu0 0.0
        %603 = vmatprep.subr.mxu0 0.0
        %604 = vmatpush1.msra.mxu0 0.0
        %605 = vmatprep.subr.mxu0 0.0
        %606 = vmatpush1.msra.mxu0 0.0
        %607 = vmatprep.subr.mxu0 0.0
        %608 = vmatpush1.msra.mxu0 0.0
        %609 = vmatprep.subr.mxu0 0.0
        %610 = vmatpush1.msra.mxu0 0.0
        %611 = vmatprep.subr.mxu0 0.0
        %612 = vmatpush1.msra.mxu0 0.0
        %613 = vmatprep.subr.mxu0 0.0
        %614 = vmatpush1.msra.mxu0 0.0
        %615 = vmatprep.subr.mxu0 0.0
        %616 = vmatpush1.msra.mxu0 0.0
        %617 = vmatprep.subr.mxu0 0.0
        %618 = vmatpush1.msra.mxu0 0.0
        %619 = vmatprep.subr.mxu0 0.0
        %620 = vmatpush1.msra.mxu0 0.0
        %621 = vmatprep.subr.mxu0 0.0
        %622 = vmatpush1.msra.mxu0 0.0
        %623 = vmatprep.subr.mxu0 0.0
        %624 = vmatpush1.msra.mxu0 0.0
        %625 = vmatprep.subr.mxu0 0.0
        %626 = vmatpush1.msra.mxu0 0.0
        %627 = vmatprep.subr.mxu0 0.0
        %628 = vmatpush1.msra.mxu0 0.0
        %629 = vmatprep.subr.mxu0 0.0
        %630 = vmatpush1.msra.mxu0 0.0
        %631 = vmatprep.subr.mxu0 0.0
        %632 = vmatpush1.msra.mxu0 0.0
        %633 = vmatprep.subr.mxu0 0.0
        %634 = vmatpush1.msra.mxu0 0.0
        %635 = vmatprep.subr.mxu0 0.0
        %636 = vmatpush1.msra.mxu0 0.0
        %637 = vmatprep.subr.mxu0 0.0
        %638 = vmatpush1.msra.mxu0 0.0
        %639 = vmatprep.subr.mxu0 0.0
        %640 = vmatpush1.msra.mxu0 0.0
        %641 = vmatprep.subr.mxu0 0.0
        %642 = vmatpush1.msra.mxu0 0.0
        %643 = vmatprep.subr.mxu0 0.0
        %644 = vmatpush1.msra.mxu0 0.0
        %645 = vmatprep.subr.mxu0 0.0
        %646 = vmatpush1.msra.mxu0 0.0
        %647 = vmatprep.subr.mxu0 0.0
        %648 = vmatpush1.msra.mxu0 0.0
        %649 = vmatprep.subr.mxu0 0.0
        %650 = vmatpush1.msra.mxu0 0.0
        %651 = vmatprep.subr.mxu0 0.0
        %652 = vmatpush1.msra.mxu0 0.0
        %653 = vmatprep.subr.mxu0 0.0
        %654 = vmatpush1.msra.mxu0 0.0
        %655 = vmatprep.subr.mxu0 0.0
        %656 = vmatpush1.msra.mxu0 0.0
        %657 = vmatprep.subr.mxu0 0.0
        %658 = vmatpush1.msra.mxu0 0.0
        %659 = vmatprep.subr.mxu0 0.0
        %660 = vmatpush1.msra.mxu0 0.0
        %661 = vmatprep.mubr.f32.mxu0 0.0
        %662 = vmatmul.mubr.f32.gmra.mrb[0].mxu0 %v591
        %v663 = vpop.f32.mrb[0].mxu0
        %v664 = vadd.f32 %v587, %v663
        %v665 = vpop.f32.mrb[0].mxu0
        %666 = vdwg.mxu0
        %v667 = vsub.f32 0.0, %v664
        %v668 = vmul.f32 %v667, 1.442695
        %v669 = vpow.pop %v668
        %v670 = vadd.f32 %v669, 1.0
        %v671 = vrcp.pop %v670
        %v672 = vmul.f32 1.0, %v671
        %v675 = vunpack.c.l.s4 1966171168
        %v676 = vunpack.c.0.s8 %v675
        %v677 = vlaneseq
        %v678 = vshrl.u32 %v677, 7
        %v679 = vsub.s32 %v676, %v678
        %v680 = vrot.slane %v672, %v679
        %v681 = vcombine.high %v680, %v680
        %v683 = vunpack.c.l.s4 1966171168
        %v684 = vunpack.c.0.s8 %v683
        %v685 = vlaneseq
        %v686 = vshrl.u32 %v685, 7
        %v687 = vsub.s32 %v684, %v686
        %v688 = vrot.slane %v680, %v687
        %v690 = vunpack.c.l.s4 1966171168
        %v691 = vunpack.c.0.s8 %v690
        %v692 = vlaneseq
        %v693 = vshrl.u32 %v692, 7
        %v694 = vsub.s32 %v691, %v693
        %v695 = vrot.slane %v681, %v694
        %vm698 = vcmask 253952
        %699 = vst.msk [vmem:[%s243] sm:$0x1] %vm698, %v688
        %700 = vst.msk [vmem:[%s243 + $0x1] sm:$0x1] %vm698, %v695
        %s701 = sand.u32 %s140, 1
        %s702 = scalar_lea.sflag [#allocation4], %s701
        %s703 = sand.u32 %s140, 1
        %s704 = smul.addr %s703, 2
        %s705 = scalar_lea.vmem [#allocation5], %s704
        // Predicated region
        $region45: #{tpu_custom_call.1} parent=39 // pred_check
          %p706 = pneg %p150
        $region46: #{tpu_custom_call.1} parent=39 // pred_check_branch
          %708 = sbr.rel (%p706) target = $region48
        $region47: #{tpu_custom_call.1} parent=39 // pred_region
          %s709 = smul.u32 2, %s22
          %s711 = ssub.s32 32, 32
          %712 = vsyncadd %s702, %s711
          %s713 = smul.addr %s709, 16
          %s714 = scalar_lea.hbm %s5, %s713
          %s715 = sshll.u32 %s705, 4
          %s716 = int_to_ptr.vmem [resolvable:$true] %s715
          %721 = dma.vmem_to_hbm [thread:$0]  %s716, 32, %s714, %s702, 16, 16, 1
        $region48: #{tpu_custom_call.1} parent=39 // pred_fallthru
          _
      $region40: #{tpu_custom_call.1} parent=5 // pred_fallthru
        _
      %p722 = scmp.le.s32.totalorder 2, %s17
      // Predicated region
      $region49: #{tpu_custom_call.1} parent=5 // pred_check
        %p723 = pneg %p722
      $region50: #{tpu_custom_call.1} parent=5 // pred_check_branch
        %725 = sbr.rel (%p723) target = $region52
      $region51: #{tpu_custom_call.1} parent=5 // pred_region
        %s726 = ssub.s32 %s17, 2
        // Predicated region
        $region53: #{tpu_custom_call.1} parent=51 // pred_check
          %p727 = pneg %p156
        $region54: #{tpu_custom_call.1} parent=51 // pred_check_branch
          %729 = sbr.rel (%p727) target = $region56
        $region55: #{tpu_custom_call.1} parent=51 // pred_region
          %s730 = sand.u32 %s141, 1
          %s731 = scalar_lea.sflag [#allocation4], %s730
          %s732 = sand.u32 %s141, 1
          %s733 = smul.addr %s732, 2
          %s734 = scalar_lea.vmem [#allocation5], %s733
          %735 = dma.done %s731, 32
        $region56: #{tpu_custom_call.1} parent=51 // pred_fallthru
          _
      $region52: #{tpu_custom_call.1} parent=5 // pred_fallthru
        _
    $region6: #{tpu_custom_call.1} parent=1 // loop_footer
      %s21 = sadd.s32 1, %s17
    $region7: #{tpu_custom_call.1} parent=1 // loop_footer_branch
      %16 = sbr.rel target = $region3
    $region8: #{tpu_custom_call.1} parent=1 // loop_exit
      _
    %736 = vsyncpa [#allocation3], 1
    %s737 = scalar_lea.sflag [#allocation3], 1
    %738 = vsyncpa %s737, 1
    %739 = vsyncpa [#allocation4], 1
    %s740 = scalar_lea.sflag [#allocation4], 1
    %741 = vsyncpa %s740, 1

</llo_original>
